<compile_context>
chip_gen: v5e
topology: v5e:2x2
jax: 0.10.0
libtpu: 0.0.40
codegen_flags: <defaults>
</compile_context>

<pallas_src>
import numpy as np
import jax
import jax.numpy as jnp
from jax import lax
from jax.experimental import pallas as pl
from jax.experimental.pallas import tpu as pltpu


def _pool_upsample_matrix(t_in, hw, kt, t_final, repeat):
    """Constant [t_final, t_in*hw] matrix folding AvgPool3d((kt, H, W), stride=1) over a
    [C, T*H*W]-flattened pathway plus nearest temporal upsample by `repeat` and the
    1/(kt*H*W) normalization into one matmul. Transposed (lane-dense THW last)."""
    t_out = t_in - kt + 1
    assert repeat * t_out == t_final
    w_t = np.zeros((t_final, t_in), dtype=np.float32)
    scale = 1.0 / float(kt * hw)
    for j in range(t_final):
        src = j // repeat                  # nearest-neighbor upsample source frame
        w_t[j, src:src + kt] = scale       # stride-1 temporal window of size kt
    # flattened column (t*hw + s) gets the same weight as temporal column t (spatial mean)
    return np.repeat(w_t, hw, axis=1)      # [t_final, t_in*hw]


def _make_head_kernel(num_pathways, chan_slices, b_tile):
    def kernel(*refs):
        x_refs = refs[:num_pathways]                   # each [B_TILE, C_p, T_p*HW_p]
        w_refs = refs[num_pathways:2 * num_pathways]   # each [T_final, T_p*HW_p]
        o_ref = refs[2 * num_pathways]                  # [B_TILE, C_total, T_final]
        for p in range(num_pathways):
            w = w_refs[p][...]                          # lane-dense pooling matrix
            lo, hi = chan_slices[p]
            for b in range(b_tile):                     # static unroll (b_tile is small)
                x = x_refs[p][b]                        # [C_p, THW_p], native dtype
                # spatial+temporal pool + upsample + scale as ONE MXU contraction
                y = lax.dot_general(
                    x, w, dimension_numbers=(((1,), (1,)), ((), ())),
                    preferred_element_type=jnp.float32)  # [C_p, T_final]
                # direct sliced store (concat fused away). Note: channel counts that are
                # not multiples of 8 make this a masked sublane store (correct, slower).
                o_ref[b, lo:hi, :] = y.astype(o_ref.dtype)
    return kernel


def _pick_batch_tile(n, per_batch_in_bytes, target_bytes=1 << 20, vmem_budget=24 << 20):
    """Fold batch elements per grid step until the input DMA is ~1 MB (roofline knee),
    keeping the double-buffered working set under the VMEM budget. Divisors only."""
    best = 1
    for d in range(1, n + 1):
        if n % d:
            continue
        if 2 * d * per_batch_in_bytes > vmem_budget:   # 2x: input double-buffering
            break
        best = d
        if d * per_batch_in_bytes >= target_bytes:
            break
    return best


def _batch_dim_semantics(grid_len):
    """CORE_PARALLEL on v7x (2 TCs/chip) when there is work to split; 'parallel' elsewhere."""
    try:
        kind = jax.devices()[0].device_kind.lower()
    except Exception:
        kind = ""
    if "v7" in kind and grid_len >= 2:
        return (pltpu.CORE_PARALLEL,)
    return ("parallel",)


def resnet_basic_head(inputs, pool_sizes, alpha, dropout_rate=0.0):
    """Forward pass matching ResNetBasicHead.forward.

    inputs: list of NCTHW pathway tensors. Returns [N, sum(C_p), T_final]
    (the `x.view(x.shape[:3])` result), channel order = pathway order.
    """
    num_pathways = len(inputs)
    assert len(pool_sizes) == num_pathways, "pathway dimensions are not consistent."
    # dropout_rate == 0.0 -> no dropout module is created; identity here.
    # TODO(synk): stochastic dropout (dropout_rate > 0) not implemented in-kernel.
    assert dropout_rate == 0.0
    assert all(x.dtype == inputs[0].dtype for x in inputs), "pathway dtypes must match"

    n = inputs[0].shape[0]
    out_dtype = jnp.dtype(inputs[0].dtype)
    # Keep MXU operands in the activation dtype (bf16/f16 -> cast W; f32 -> keep f32).
    w_dtype = out_dtype if out_dtype in (jnp.dtype(jnp.bfloat16), jnp.dtype(jnp.float16)) \
        else jnp.dtype(jnp.float32)

    params = []
    for p in range(num_pathways):
        _, c, t, h, w = inputs[p].shape
        ps = pool_sizes[p]
        # pool_size None == AdaptiveAvgPool3d((1,1,1)) == AvgPool3d((T,H,W), stride=1)
        kt, kh, kw = (t, h, w) if ps is None else ps
        assert kh == h and kw == w, "spatial pool kernel must cover full H, W (1x1 spatial out)"
        params.append((c, t, h, w, kt, t - kt + 1))

    # final temporal length is set by the last pathway (it is not upsampled)
    t_final = params[-1][5]

    xs, ws, c_list = [], [], []
    for p in range(num_pathways):
        c, t, h, w, kt, t_out = params[p]
        repeat = 1 if p == num_pathways - 1 else alpha
        assert repeat * t_out == t_final, (
            f"pathway {p}: upsampled temporal length {repeat * t_out} != {t_final}; "
            f"channel concat would be ill-shaped")
        # free reshape of contiguous NCTHW (no relayout copy)
        xs.append(inputs[p].reshape(n, c, t * h * w))
        ws.append(jnp.asarray(_pool_upsample_matrix(t, h * w, kt, t_final, repeat),
                              dtype=w_dtype))
        c_list.append(c)

    offs = np.cumsum([0] + c_list)
    chan_slices = [(int(offs[p]), int(offs[p + 1])) for p in range(num_pathways)]
    c_total = int(offs[-1])

    itemsize = out_dtype.itemsize
    per_batch_in_bytes = sum(int(x.shape[1]) * int(x.shape[2]) * itemsize for x in xs)
    b_tile = _pick_batch_tile(n, per_batch_in_bytes)
    grid_len = n // b_tile

    kernel = _make_head_kernel(num_pathways, chan_slices, b_tile)

    in_specs = []
    for p in range(num_pathways):
        c_p, thw_p = int(xs[p].shape[1]), int(xs[p].shape[2])
        in_specs.append(pl.BlockSpec((b_tile, c_p, thw_p), lambda i: (i, 0, 0)))
    for p in range(num_pathways):
        # grid-invariant, tiny, lane-dense weights (no lane padding)
        in_specs.append(pl.BlockSpec(ws[p].shape, lambda i: (0, 0)))
    out_spec = pl.BlockSpec((b_tile, c_total, t_final), lambda i: (i, 0, 0))

    flops = int(sum(2 * n * int(xs[p].shape[1]) * int(xs[p].shape[2]) * t_final
                    for p in range(num_pathways)))
    bytes_accessed = int(
        sum(int(x.size) * x.dtype.itemsize for x in xs)
        + sum(int(w.size) * w.dtype.itemsize for w in ws)
        + n * c_total * t_final * itemsize)

    out = pl.pallas_call(
        kernel,
        out_shape=jax.ShapeDtypeStruct((n, c_total, t_final), out_dtype),
        grid_spec=pltpu.PrefetchScalarGridSpec(
            num_scalar_prefetch=0,
            grid=(grid_len,),                 # batch axis (possibly batch-folded)
            in_specs=in_specs,
            out_specs=out_spec,
        ),
        compiler_params=pltpu.CompilerParams(
            dimension_semantics=_batch_dim_semantics(grid_len),
            # working set is capped at ~24 MiB by _pick_batch_tile, so 32 MiB is safe on
            # v5e/v6e/v7x alike (v5e default scoped limit is only 16 MiB -> set explicitly).
            vmem_limit_bytes=32 * 1024 * 1024,
        ),
        cost_estimate=pl.CostEstimate(
            flops=flops, transcendentals=0, bytes_accessed=bytes_accessed),
    )(*xs, *ws)
    return out  # [N, C_total, T_final]


def _reference_head(inputs, pool_sizes, alpha):
    """Pure-JAX reference for validation (mirrors the PyTorch semantics)."""
    outs = []
    for p, x in enumerate(inputs):
        n, c, t, h, w = x.shape
        kt, kh, kw = pool_sizes[p] if pool_sizes[p] is not None else (t, h, w)
        t_out = t - kt + 1
        y = jnp.stack(
            [jnp.mean(x[:, :, dt:dt + kt, :, :], axis=(2, 3, 4)) for dt in range(t_out)],
            axis=2,
        )  # [N, C, T_out]
        if p != len(inputs) - 1:
            y = jnp.repeat(y, alpha, axis=2)
        outs.append(y)
    return jnp.concatenate(outs, axis=1)


if __name__ == "__main__":
    key = jax.random.PRNGKey(0)
    k_slow, k_fast = jax.random.split(key)

    ALPHA = 4  # cfg.SLOWFAST.ALPHA
    # Slow pathway: [N, C0, T, H, W] = [2, 8, 4, 8, 8], pool (3, 8, 8) -> T_out = 2 -> x4 = 8
    # Fast pathway: [N, C1, T, H, W] = [2, 4, 16, 8, 8], pool (9, 8, 8) -> T_out = 8
    slow = jax.random.normal(k_slow, (2, 8, 4, 8, 8), dtype=jnp.float32)
    fast = jax.random.normal(k_fast, (2, 4, 16, 8, 8), dtype=jnp.float32)
    pool_sizes = [(3, 8, 8), (9, 8, 8)]

    out = resnet_basic_head([slow, fast], pool_sizes, ALPHA, dropout_rate=0.0)
    out = jax.block_until_ready(out)

    ref = _reference_head([slow, fast], pool_sizes, ALPHA)
    assert out.shape == (2, 12, 8), out.shape
    # tolerance accounts for reduced-precision MXU passes on f32 operands
    assert jnp.allclose(out, ref, atol=2e-3, rtol=2e-3), "mismatch vs reference"

    print("KERNEL_OK")
</pallas_src>

<mosaic_0001>
module attributes {stable_mosaic.version = 11 : i64} {
  func.func @kernel(%arg0: i32, %arg1: memref<2x8x256xf32, #tpu.memory_space<vmem>>, %arg2: memref<2x4x1024xf32, #tpu.memory_space<vmem>>, %arg3: memref<8x256xf32, #tpu.memory_space<vmem>>, %arg4: memref<8x1024xf32, #tpu.memory_space<vmem>>, %arg5: memref<2x12x8xf32, #tpu.memory_space<vmem>>) attributes {dimension_semantics = [#tpu.dimension_semantics<parallel>], iteration_bounds = array<i64: 1>, scalar_prefetch = 0 : i64, scratch_operands = 0 : i64, tpu.core_type = #tpu.core_type<tc>, window_params = [{transform_indices = @transform_0, window_bounds = array<i64: 2, 8, 256>}, {transform_indices = @transform_1, window_bounds = array<i64: 2, 4, 1024>}, {pipeline_mode = #tpu.pipeline_mode<synchronous>, transform_indices = @transform_2, window_bounds = array<i64: 8, 256>}, {pipeline_mode = #tpu.pipeline_mode<synchronous>, transform_indices = @transform_3, window_bounds = array<i64: 8, 1024>}, {transform_indices = @transform_4, window_bounds = array<i64: 2, 12, 8>}]} {
    %c0 = arith.constant 0 : index
    %c0_0 = arith.constant 0 : index
    %0 = vector.load %arg3[%c0, %c0_0] : memref<8x256xf32, #tpu.memory_space<vmem>>, vector<8x256xf32>
    %c0_1 = arith.constant 0 : index
    %c0_2 = arith.constant 0 : index
    %c0_3 = arith.constant 0 : index
    %1 = vector.load %arg1[%c0_1, %c0_2, %c0_3] : memref<2x8x256xf32, #tpu.memory_space<vmem>>, vector<1x8x256xf32>
    %2 = vector.shape_cast %1 : vector<1x8x256xf32> to vector<8x256xf32>
    %cst = arith.constant dense<0.000000e+00> : vector<8x8xf32>
    %3 = tpu.matmul %2, %0, %cst {dimension_numbers = #tpu.dot_dimension_numbers<[1], [1], [0], [0], [0, 0, 1, 0], [], []>} : vector<8x256xf32>, vector<8x256xf32>, vector<8x8xf32> -> vector<8x8xf32>
    %c0_4 = arith.constant 0 : index
    %c0_5 = arith.constant 0 : index
    %c0_6 = arith.constant 0 : index
    %4 = vector.load %arg5[%c0_4, %c0_5, %c0_6] : memref<2x12x8xf32, #tpu.memory_space<vmem>>, vector<1x8x8xf32>
    %5 = vector.shape_cast %4 : vector<1x8x8xf32> to vector<8x8xf32>
    %6 = vector.shape_cast %3 : vector<8x8xf32> to vector<1x8x8xf32>
    tpu.vector_store %arg5[%c0_4, %c0_5, %c0_6], %6 {strides = array<i32>} : memref<2x12x8xf32, #tpu.memory_space<vmem>>, vector<1x8x8xf32>,
    %c1 = arith.constant 1 : index
    %c0_7 = arith.constant 0 : index
    %c0_8 = arith.constant 0 : index
    %7 = vector.load %arg1[%c1, %c0_7, %c0_8] : memref<2x8x256xf32, #tpu.memory_space<vmem>>, vector<1x8x256xf32>
    %8 = vector.shape_cast %7 : vector<1x8x256xf32> to vector<8x256xf32>
    %cst_9 = arith.constant dense<0.000000e+00> : vector<8x8xf32>
    %9 = tpu.matmul %8, %0, %cst_9 {dimension_numbers = #tpu.dot_dimension_numbers<[1], [1], [0], [0], [0, 0, 1, 0], [], []>} : vector<8x256xf32>, vector<8x256xf32>, vector<8x8xf32> -> vector<8x8xf32>
    %c1_10 = arith.constant 1 : index
    %c0_11 = arith.constant 0 : index
    %c0_12 = arith.constant 0 : index
    %10 = vector.load %arg5[%c1_10, %c0_11, %c0_12] : memref<2x12x8xf32, #tpu.memory_space<vmem>>, vector<1x8x8xf32>
    %11 = vector.shape_cast %10 : vector<1x8x8xf32> to vector<8x8xf32>
    %12 = vector.shape_cast %9 : vector<8x8xf32> to vector<1x8x8xf32>
    tpu.vector_store %arg5[%c1_10, %c0_11, %c0_12], %12 {strides = array<i32>} : memref<2x12x8xf32, #tpu.memory_space<vmem>>, vector<1x8x8xf32>,
    %c0_13 = arith.constant 0 : index
    %c0_14 = arith.constant 0 : index
    %13 = vector.load %arg4[%c0_13, %c0_14] : memref<8x1024xf32, #tpu.memory_space<vmem>>, vector<8x1024xf32>
    %c0_15 = arith.constant 0 : index
    %c0_16 = arith.constant 0 : index
    %c0_17 = arith.constant 0 : index
    %14 = vector.load %arg2[%c0_15, %c0_16, %c0_17] : memref<2x4x1024xf32, #tpu.memory_space<vmem>>, vector<1x4x1024xf32>
    %15 = vector.shape_cast %14 : vector<1x4x1024xf32> to vector<4x1024xf32>
    %cst_18 = arith.constant dense<0.000000e+00> : vector<4x8xf32>
    %16 = tpu.matmul %15, %13, %cst_18 {dimension_numbers = #tpu.dot_dimension_numbers<[1], [1], [0], [0], [0, 0, 1, 0], [], []>} : vector<4x1024xf32>, vector<8x1024xf32>, vector<4x8xf32> -> vector<4x8xf32>
    %c0_19 = arith.constant 0 : index
    %c8 = arith.constant 8 : index
    %c0_20 = arith.constant 0 : index
    %17 = vector.load %arg5[%c0_19, %c8, %c0_20] : memref<2x12x8xf32, #tpu.memory_space<vmem>>, vector<1x4x8xf32>
    %18 = vector.shape_cast %17 : vector<1x4x8xf32> to vector<4x8xf32>
    %19 = vector.shape_cast %16 : vector<4x8xf32> to vector<1x4x8xf32>
    tpu.vector_store %arg5[%c0_19, %c8, %c0_20], %19 {strides = array<i32>} : memref<2x12x8xf32, #tpu.memory_space<vmem>>, vector<1x4x8xf32>,
    %c1_21 = arith.constant 1 : index
    %c0_22 = arith.constant 0 : index
    %c0_23 = arith.constant 0 : index
    %20 = vector.load %arg2[%c1_21, %c0_22, %c0_23] : memref<2x4x1024xf32, #tpu.memory_space<vmem>>, vector<1x4x1024xf32>
    %21 = vector.shape_cast %20 : vector<1x4x1024xf32> to vector<4x1024xf32>
    %cst_24 = arith.constant dense<0.000000e+00> : vector<4x8xf32>
    %22 = tpu.matmul %21, %13, %cst_24 {dimension_numbers = #tpu.dot_dimension_numbers<[1], [1], [0], [0], [0, 0, 1, 0], [], []>} : vector<4x1024xf32>, vector<8x1024xf32>, vector<4x8xf32> -> vector<4x8xf32>
    %c1_25 = arith.constant 1 : index
    %c8_26 = arith.constant 8 : index
    %c0_27 = arith.constant 0 : index
    %23 = vector.load %arg5[%c1_25, %c8_26, %c0_27] : memref<2x12x8xf32, #tpu.memory_space<vmem>>, vector<1x4x8xf32>
    %24 = vector.shape_cast %23 : vector<1x4x8xf32> to vector<4x8xf32>
    %25 = vector.shape_cast %22 : vector<4x8xf32> to vector<1x4x8xf32>
    tpu.vector_store %arg5[%c1_25, %c8_26, %c0_27], %25 {strides = array<i32>} : memref<2x12x8xf32, #tpu.memory_space<vmem>>, vector<1x4x8xf32>,
    return
  }
  func.func @transform_0(%arg0: i32) -> (i32, i32, i32) {
    %c0_i32 = arith.constant 0 : i32
    %c0_i32_0 = arith.constant 0 : i32
    %c0_i32_1 = arith.constant 0 : i32
    return %arg0, %c0_i32, %c0_i32_0 : i32, i32, i32
  }
  func.func @transform_1(%arg0: i32) -> (i32, i32, i32) {
    %c0_i32 = arith.constant 0 : i32
    %c0_i32_0 = arith.constant 0 : i32
    %c0_i32_1 = arith.constant 0 : i32
    return %arg0, %c0_i32, %c0_i32_0 : i32, i32, i32
  }
  func.func @transform_2(%arg0: i32) -> (i32, i32) {
    %c0_i32 = arith.constant 0 : i32
    %c0_i32_0 = arith.constant 0 : i32
    %c0_i32_1 = arith.constant 0 : i32
    return %c0_i32, %c0_i32_0 : i32, i32
  }
  func.func @transform_3(%arg0: i32) -> (i32, i32) {
    %c0_i32 = arith.constant 0 : i32
    %c0_i32_0 = arith.constant 0 : i32
    %c0_i32_1 = arith.constant 0 : i32
    return %c0_i32, %c0_i32_0 : i32, i32
  }
  func.func @transform_4(%arg0: i32) -> (i32, i32, i32) {
    %c0_i32 = arith.constant 0 : i32
    %c0_i32_0 = arith.constant 0 : i32
    %c0_i32_1 = arith.constant 0 : i32
    return %arg0, %c0_i32, %c0_i32_0 : i32, i32, i32
  }
}

</mosaic_0001>

<llo_original>
// kernel: tpu_custom_call.1
$region0: #{tpu_custom_call.1}
  #allocation0 [shape = 'u32[]', space=smem, size = 0x4, offset = 0x4, fixed_abs, tag = 'smem constant byte address 0x4 - core index']
  #allocation1 [shape = 'u32[72,128]{1,0:T(1,128)}', space=vmem, size = 0x9000, scoped, tag = 'internal scratch']
  %s0 = inlined_call_operand.hbm [shape: f32[2,8,256], index: 0, kind: input, shape index: {}]
  %s1 = inlined_call_operand.hbm [shape: f32[2,4,1024], index: 1, kind: input, shape index: {}]
  %s2 = inlined_call_operand.hbm [shape: f32[8,256], index: 2, kind: input, shape index: {}]
  %s3 = inlined_call_operand.hbm [shape: f32[8,1024], index: 3, kind: input, shape index: {}]
  %s4 = inlined_call_operand.vmem [shape: f32[2,12,8], index: 4, kind: output, shape index: {}]
  %s5 = sld [smem:[#allocation0]]
  $region42: #{tpu_custom_call.1} parent=0
    _
  %s7 = ssub.s32 1, %s5
  %s8 = scalar_select 0, %s7, %s5
  $region1: #{tpu_custom_call.1} parent=0
    #allocation2 [shape = 'u8[16384]{0}', space=vmem, size = 0x4000, scoped, tag = 'input window, operand 0, single buffered']
    #allocation3 [shape = 's32[1]{0}', space=sflag, size = 0x4, scoped, tag = 'scoped memory for tpu_custom_call.1']
    #allocation4 [shape = 'u8[32768]{0}', space=vmem, size = 0x8000, scoped, tag = 'input window, operand 1, single buffered']
    #allocation5 [shape = 's32[1]{0}', space=sflag, size = 0x4, scoped, tag = 'scoped memory for tpu_custom_call.1']
    #allocation6 [shape = 'u8[8192]{0}', space=vmem, size = 0x2000, scoped, tag = 'input window, operand 2, single buffered']
    #allocation7 [shape = 'u8[32768]{0}', space=vmem, size = 0x8000, scoped, tag = 'input window, operand 3, single buffered']
    #allocation8 [shape = 's32[1]{0}', space=sflag, size = 0x4, scoped, tag = 'scoped memory for tpu_custom_call.1']
    %9 = vsyncpa [#allocation3], 0
    %10 = vsyncpa [#allocation5], 0
    %11 = vsyncpa [#allocation8], 0
    // Predicated region
    $region2: #{tpu_custom_call.1} parent=1 // pred_check
      _
    $region3: #{tpu_custom_call.1} parent=1 // pred_check_branch
      %13 = sbr.rel (0) target = $region5
    $region4: #{tpu_custom_call.1} parent=1 // pred_region
      %15 = vsyncadd [#allocation3], 0
      %s16 = sshll.u32 %s0, 4
      %s17 = int_to_ptr.hbm [resolvable:$true] %s16
      %s18 = sshll.u32 [#allocation2], 4
      %s19 = int_to_ptr.vmem [resolvable:$true] %s18
      %24 = dma.hbm_to_vmem [thread:$0]  %s17, 512, %s19, [#allocation3], 256, 256, 16
    $region5: #{tpu_custom_call.1} parent=1 // pred_fallthru
      _
    // Predicated region
    $region6: #{tpu_custom_call.1} parent=1 // pred_check
      _
    $region7: #{tpu_custom_call.1} parent=1 // pred_check_branch
      %26 = sbr.rel (0) target = $region9
    $region8: #{tpu_custom_call.1} parent=1 // pred_region
      %28 = vsyncadd [#allocation5], 0
      %s29 = sshll.u32 %s1, 4
      %s30 = int_to_ptr.hbm [resolvable:$true] %s29
      %s31 = sshll.u32 [#allocation4], 4
      %s32 = int_to_ptr.vmem [resolvable:$true] %s31
      %37 = dma.hbm_to_vmem [thread:$0]  %s30, 1024, %s32, [#allocation5], 512, 512, 32
    $region9: #{tpu_custom_call.1} parent=1 // pred_fallthru
      _
    // Predicated region
    $region10: #{tpu_custom_call.1} parent=1 // pred_check
      _
    $region11: #{tpu_custom_call.1} parent=1 // pred_check_branch
      %39 = sbr.rel (0) target = $region13
    $region12: #{tpu_custom_call.1} parent=1 // pred_region
      %41 = vsyncadd [#allocation5], 0
      %s43 = sshll.u32 %s2, 4
      %s44 = int_to_ptr.hbm [resolvable:$true] %s43
      %s45 = sshll.u32 [#allocation6], 4
      %s46 = int_to_ptr.vmem [resolvable:$true] %s45
      %48 = dma.hbm_to_vmem [thread:$0]  %s44, 256, %s46, [#allocation5]
    $region13: #{tpu_custom_call.1} parent=1 // pred_fallthru
      _
    // Predicated region
    $region14: #{tpu_custom_call.1} parent=1 // pred_check
      _
    $region15: #{tpu_custom_call.1} parent=1 // pred_check_branch
      %50 = sbr.rel (0) target = $region17
    $region16: #{tpu_custom_call.1} parent=1 // pred_region
      %52 = vsyncadd [#allocation8], 0
      %s54 = sshll.u32 %s3, 4
      %s55 = int_to_ptr.hbm [resolvable:$true] %s54
      %s56 = sshll.u32 [#allocation7], 4
      %s57 = int_to_ptr.vmem [resolvable:$true] %s56
      %59 = dma.hbm_to_vmem [thread:$0]  %s55, 1024, %s57, [#allocation8]
    $region17: #{tpu_custom_call.1} parent=1 // pred_fallthru
      _
    // Predicated region
    $region18: #{tpu_custom_call.1} parent=1 // pred_check
      _
    $region19: #{tpu_custom_call.1} parent=1 // pred_check_branch
      %61 = sbr.rel (0) target = $region21
    $region20: #{tpu_custom_call.1} parent=1 // pred_region
      %63 = dma.done [#allocation3], 512
    $region21: #{tpu_custom_call.1} parent=1 // pred_fallthru
      _
    // Predicated region
    $region22: #{tpu_custom_call.1} parent=1 // pred_check
      _
    $region23: #{tpu_custom_call.1} parent=1 // pred_check_branch
      %65 = sbr.rel (0) target = $region25
    $region24: #{tpu_custom_call.1} parent=1 // pred_region
      %67 = dma.done [#allocation5], 1024
    $region25: #{tpu_custom_call.1} parent=1 // pred_fallthru
      _
    // Predicated region
    $region26: #{tpu_custom_call.1} parent=1 // pred_check
      _
    $region27: #{tpu_custom_call.1} parent=1 // pred_check_branch
      %69 = sbr.rel (0) target = $region29
    $region28: #{tpu_custom_call.1} parent=1 // pred_region
      %71 = dma.done [#allocation5], 256
    $region29: #{tpu_custom_call.1} parent=1 // pred_fallthru
      _
    // Predicated region
    $region30: #{tpu_custom_call.1} parent=1 // pred_check
      _
    $region31: #{tpu_custom_call.1} parent=1 // pred_check_branch
      %73 = sbr.rel (0) target = $region33
    $region32: #{tpu_custom_call.1} parent=1 // pred_region
      %75 = dma.done [#allocation8], 1024
    $region33: #{tpu_custom_call.1} parent=1 // pred_fallthru
      _
    %v76 = vld [vmem:[#allocation6] sm:$0xff]
    %v77 = vld [vmem:[#allocation6 + $0x8] sm:$0xff]
    %v78 = vld [vmem:[#allocation2] sm:$0xff]
    %v79 = vld [vmem:[#allocation2 + $0x8] sm:$0xff]
    %80 = vmatpush.xpose.msra.mxu0 0.0
    %81 = vmatpush.xpose.msra.mxu0 0.0
    %82 = vmatpush.xpose.msra.mxu0 0.0
    %83 = vmatpush.xpose.msra.mxu0 0.0
    %84 = vmatpush.xpose.msra.mxu0 0.0
    %85 = vmatpush.xpose.msra.mxu0 0.0
    %86 = vmatpush.xpose.msra.mxu0 0.0
    %87 = vmatpush.xpose.msra.mxu0 0.0
    %88 = vmatpush.xpose.msra.mxu0 0.0
    %89 = vmatpush.xpose.msra.mxu0 0.0
    %90 = vmatpush.xpose.msra.mxu0 0.0
    %91 = vmatpush.xpose.msra.mxu0 0.0
    %92 = vmatpush.xpose.msra.mxu0 0.0
    %93 = vmatpush.xpose.msra.mxu0 0.0
    %94 = vmatpush.xpose.msra.mxu0 0.0
    %95 = vmatpush.xpose.msra.mxu0 %v76
    %96 = vmatmul.f32.gmra.mxu0 %v78
    %v97 = vpop.f32.mrf.mxu0
    %v98 = vadd.f32 0.0, %v97
    %99 = vdwg.mxu0
    %100 = vmatpush.xpose.msra.mxu0 0.0
    %101 = vmatpush.xpose.msra.mxu0 0.0
    %102 = vmatpush.xpose.msra.mxu0 0.0
    %103 = vmatpush.xpose.msra.mxu0 0.0
    %104 = vmatpush.xpose.msra.mxu0 0.0
    %105 = vmatpush.xpose.msra.mxu0 0.0
    %106 = vmatpush.xpose.msra.mxu0 0.0
    %107 = vmatpush.xpose.msra.mxu0 0.0
    %108 = vmatpush.xpose.msra.mxu0 0.0
    %109 = vmatpush.xpose.msra.mxu0 0.0
    %110 = vmatpush.xpose.msra.mxu0 0.0
    %111 = vmatpush.xpose.msra.mxu0 0.0
    %112 = vmatpush.xpose.msra.mxu0 0.0
    %113 = vmatpush.xpose.msra.mxu0 0.0
    %114 = vmatpush.xpose.msra.mxu0 0.0
    %115 = vmatpush.xpose.msra.mxu0 %v77
    %116 = vmatmul.f32.gmra.mxu0 %v79
    %v117 = vpop.f32.mrf.mxu0
    %v118 = vadd.f32 %v98, %v117
    %119 = vdwg.mxu0
    %vm120 = vcmask 64512
    %121 = vst.msk [vmem:[%s4] sm:$0xff] %vm120, %v118
    %s122 = scalar_lea.vmem [#allocation2], 16
    %v123 = vld [vmem:[%s122] sm:$0xff]
    %v124 = vld [vmem:[%s122 + $0x8] sm:$0xff]
    %125 = vmatpush.xpose.msra.mxu0 0.0
    %126 = vmatpush.xpose.msra.mxu0 0.0
    %127 = vmatpush.xpose.msra.mxu0 0.0
    %128 = vmatpush.xpose.msra.mxu0 0.0
    %129 = vmatpush.xpose.msra.mxu0 0.0
    %130 = vmatpush.xpose.msra.mxu0 0.0
    %131 = vmatpush.xpose.msra.mxu0 0.0
    %132 = vmatpush.xpose.msra.mxu0 0.0
    %133 = vmatpush.xpose.msra.mxu0 0.0
    %134 = vmatpush.xpose.msra.mxu0 0.0
    %135 = vmatpush.xpose.msra.mxu0 0.0
    %136 = vmatpush.xpose.msra.mxu0 0.0
    %137 = vmatpush.xpose.msra.mxu0 0.0
    %138 = vmatpush.xpose.msra.mxu0 0.0
    %139 = vmatpush.xpose.msra.mxu0 0.0
    %140 = vmatpush.xpose.msra.mxu0 %v76
    %141 = vmatmul.f32.gmra.mxu0 %v123
    %v142 = vpop.f32.mrf.mxu0
    %v143 = vadd.f32 0.0, %v142
    %144 = vdwg.mxu0
    %145 = vmatpush.xpose.msra.mxu0 0.0
    %146 = vmatpush.xpose.msra.mxu0 0.0
    %147 = vmatpush.xpose.msra.mxu0 0.0
    %148 = vmatpush.xpose.msra.mxu0 0.0
    %149 = vmatpush.xpose.msra.mxu0 0.0
    %150 = vmatpush.xpose.msra.mxu0 0.0
    %151 = vmatpush.xpose.msra.mxu0 0.0
    %152 = vmatpush.xpose.msra.mxu0 0.0
    %153 = vmatpush.xpose.msra.mxu0 0.0
    %154 = vmatpush.xpose.msra.mxu0 0.0
    %155 = vmatpush.xpose.msra.mxu0 0.0
    %156 = vmatpush.xpose.msra.mxu0 0.0
    %157 = vmatpush.xpose.msra.mxu0 0.0
    %158 = vmatpush.xpose.msra.mxu0 0.0
    %159 = vmatpush.xpose.msra.mxu0 0.0
    %160 = vmatpush.xpose.msra.mxu0 %v77
    %161 = vmatmul.f32.gmra.mxu0 %v124
    %v162 = vpop.f32.mrf.mxu0
    %v163 = vadd.f32 %v143, %v162
    %164 = vdwg.mxu0
    %s165 = scalar_lea.vmem %s4, 16
    %166 = vst.msk [vmem:[%s165] sm:$0xff] %vm120, %v163
    %v167 = vld [vmem:[#allocation7] sm:$0xff]
    %v168 = vld [vmem:[#allocation7 + $0x8] sm:$0xff]
    %v169 = vld [vmem:[#allocation7 + $0x10] sm:$0xff]
    %v170 = vld [vmem:[#allocation7 + $0x18] sm:$0xff]
    %v171 = vld [vmem:[#allocation7 + $0x20] sm:$0xff]
    %v172 = vld [vmem:[#allocation7 + $0x28] sm:$0xff]
    %v173 = vld [vmem:[#allocation7 + $0x30] sm:$0xff]
    %v174 = vld [vmem:[#allocation7 + $0x38] sm:$0xff]
    %v175 = vld [vmem:[#allocation4] sm:$0xff]
    %v176 = vld [vmem:[#allocation4 + $0x8] sm:$0xff]
    %v177 = vld [vmem:[#allocation4 + $0x10] sm:$0xff]
    %v178 = vld [vmem:[#allocation4 + $0x18] sm:$0xff]
    %183 = vst [vmem:[#allocation1] ss:$2 sm:$0xff] %v175
    %s184 = scalar_lea.vmem [#allocation1], 16
    %185 = vst [vmem:[%s184] ss:$2 sm:$0xff] %v176
    %s186 = scalar_lea.vmem [#allocation1], 32
    %187 = vst [vmem:[%s186] ss:$2 sm:$0xff] %v177
    %s188 = scalar_lea.vmem [#allocation1], 48
    %189 = vst [vmem:[%s188] ss:$2 sm:$0xff] %v178
    %v190 = vld.sshfl [vmem:[#allocation1] sm:$0xff pattern:$0x75316420]
    %v191 = vld.sshfl [vmem:[#allocation1 + $0x8] sm:$0xff pattern:$0x75316420]
    %v192 = vld.sshfl [vmem:[#allocation1 + $0x10] sm:$0xff pattern:$0x75316420]
    %v193 = vld.sshfl [vmem:[#allocation1 + $0x18] sm:$0xff pattern:$0x75316420]
    %v194 = vld.sshfl [vmem:[#allocation1 + $0x20] sm:$0xff pattern:$0x75316420]
    %v195 = vld.sshfl [vmem:[#allocation1 + $0x28] sm:$0xff pattern:$0x75316420]
    %v196 = vld.sshfl [vmem:[#allocation1 + $0x30] sm:$0xff pattern:$0x75316420]
    %v197 = vld.sshfl [vmem:[#allocation1 + $0x38] sm:$0xff pattern:$0x75316420]
    %206 = vmatpush.xpose.msra.mxu0 0.0
    %207 = vmatpush.xpose.msra.mxu0 0.0
    %208 = vmatpush.xpose.msra.mxu0 0.0
    %209 = vmatpush.xpose.msra.mxu0 0.0
    %210 = vmatpush.xpose.msra.mxu0 0.0
    %211 = vmatpush.xpose.msra.mxu0 0.0
    %212 = vmatpush.xpose.msra.mxu0 0.0
    %213 = vmatpush.xpose.msra.mxu0 0.0
    %214 = vmatpush.xpose.msra.mxu0 0.0
    %215 = vmatpush.xpose.msra.mxu0 0.0
    %216 = vmatpush.xpose.msra.mxu0 0.0
    %217 = vmatpush.xpose.msra.mxu0 0.0
    %218 = vmatpush.xpose.msra.mxu0 0.0
    %219 = vmatpush.xpose.msra.mxu0 0.0
    %220 = vmatpush.xpose.msra.mxu0 0.0
    %221 = vmatpush.xpose.msra.mxu0 %v167
    %222 = vmatmul.f32.gmra.mxu0 %v190
    %v223 = vpop.f32.mrf.mxu0
    %v224 = vadd.f32 0.0, %v223
    %225 = vdwg.mxu0
    %226 = vmatpush.xpose.msra.mxu0 0.0
    %227 = vmatpush.xpose.msra.mxu0 0.0
    %228 = vmatpush.xpose.msra.mxu0 0.0
    %229 = vmatpush.xpose.msra.mxu0 0.0
    %230 = vmatpush.xpose.msra.mxu0 0.0
    %231 = vmatpush.xpose.msra.mxu0 0.0
    %232 = vmatpush.xpose.msra.mxu0 0.0
    %233 = vmatpush.xpose.msra.mxu0 0.0
    %234 = vmatpush.xpose.msra.mxu0 0.0
    %235 = vmatpush.xpose.msra.mxu0 0.0
    %236 = vmatpush.xpose.msra.mxu0 0.0
    %237 = vmatpush.xpose.msra.mxu0 0.0
    %238 = vmatpush.xpose.msra.mxu0 0.0
    %239 = vmatpush.xpose.msra.mxu0 0.0
    %240 = vmatpush.xpose.msra.mxu0 0.0
    %241 = vmatpush.xpose.msra.mxu0 %v168
    %242 = vmatmul.f32.gmra.mxu0 %v191
    %v243 = vpop.f32.mrf.mxu0
    %v244 = vadd.f32 %v224, %v243
    %245 = vdwg.mxu0
    %246 = vmatpush.xpose.msra.mxu0 0.0
    %247 = vmatpush.xpose.msra.mxu0 0.0
    %248 = vmatpush.xpose.msra.mxu0 0.0
    %249 = vmatpush.xpose.msra.mxu0 0.0
    %250 = vmatpush.xpose.msra.mxu0 0.0
    %251 = vmatpush.xpose.msra.mxu0 0.0
    %252 = vmatpush.xpose.msra.mxu0 0.0
    %253 = vmatpush.xpose.msra.mxu0 0.0
    %254 = vmatpush.xpose.msra.mxu0 0.0
    %255 = vmatpush.xpose.msra.mxu0 0.0
    %256 = vmatpush.xpose.msra.mxu0 0.0
    %257 = vmatpush.xpose.msra.mxu0 0.0
    %258 = vmatpush.xpose.msra.mxu0 0.0
    %259 = vmatpush.xpose.msra.mxu0 0.0
    %260 = vmatpush.xpose.msra.mxu0 0.0
    %261 = vmatpush.xpose.msra.mxu0 %v169
    %262 = vmatmul.f32.gmra.mxu0 %v192
    %v263 = vpop.f32.mrf.mxu0
    %v264 = vadd.f32 %v244, %v263
    %265 = vdwg.mxu0
    %266 = vmatpush.xpose.msra.mxu0 0.0
    %267 = vmatpush.xpose.msra.mxu0 0.0
    %268 = vmatpush.xpose.msra.mxu0 0.0
    %269 = vmatpush.xpose.msra.mxu0 0.0
    %270 = vmatpush.xpose.msra.mxu0 0.0
    %271 = vmatpush.xpose.msra.mxu0 0.0
    %272 = vmatpush.xpose.msra.mxu0 0.0
    %273 = vmatpush.xpose.msra.mxu0 0.0
    %274 = vmatpush.xpose.msra.mxu0 0.0
    %275 = vmatpush.xpose.msra.mxu0 0.0
    %276 = vmatpush.xpose.msra.mxu0 0.0
    %277 = vmatpush.xpose.msra.mxu0 0.0
    %278 = vmatpush.xpose.msra.mxu0 0.0
    %279 = vmatpush.xpose.msra.mxu0 0.0
    %280 = vmatpush.xpose.msra.mxu0 0.0
    %281 = vmatpush.xpose.msra.mxu0 %v170
    %282 = vmatmul.f32.gmra.mxu0 %v193
    %v283 = vpop.f32.mrf.mxu0
    %v284 = vadd.f32 %v264, %v283
    %285 = vdwg.mxu0
    %286 = vmatpush.xpose.msra.mxu0 0.0
    %287 = vmatpush.xpose.msra.mxu0 0.0
    %288 = vmatpush.xpose.msra.mxu0 0.0
    %289 = vmatpush.xpose.msra.mxu0 0.0
    %290 = vmatpush.xpose.msra.mxu0 0.0
    %291 = vmatpush.xpose.msra.mxu0 0.0
    %292 = vmatpush.xpose.msra.mxu0 0.0
    %293 = vmatpush.xpose.msra.mxu0 0.0
    %294 = vmatpush.xpose.msra.mxu0 0.0
    %295 = vmatpush.xpose.msra.mxu0 0.0
    %296 = vmatpush.xpose.msra.mxu0 0.0
    %297 = vmatpush.xpose.msra.mxu0 0.0
    %298 = vmatpush.xpose.msra.mxu0 0.0
    %299 = vmatpush.xpose.msra.mxu0 0.0
    %300 = vmatpush.xpose.msra.mxu0 0.0
    %301 = vmatpush.xpose.msra.mxu0 %v171
    %302 = vmatmul.f32.gmra.mxu0 %v194
    %v303 = vpop.f32.mrf.mxu0
    %v304 = vadd.f32 %v284, %v303
    %305 = vdwg.mxu0
    %306 = vmatpush.xpose.msra.mxu0 0.0
    %307 = vmatpush.xpose.msra.mxu0 0.0
    %308 = vmatpush.xpose.msra.mxu0 0.0
    %309 = vmatpush.xpose.msra.mxu0 0.0
    %310 = vmatpush.xpose.msra.mxu0 0.0
    %311 = vmatpush.xpose.msra.mxu0 0.0
    %312 = vmatpush.xpose.msra.mxu0 0.0
    %313 = vmatpush.xpose.msra.mxu0 0.0
    %314 = vmatpush.xpose.msra.mxu0 0.0
    %315 = vmatpush.xpose.msra.mxu0 0.0
    %316 = vmatpush.xpose.msra.mxu0 0.0
    %317 = vmatpush.xpose.msra.mxu0 0.0
    %318 = vmatpush.xpose.msra.mxu0 0.0
    %319 = vmatpush.xpose.msra.mxu0 0.0
    %320 = vmatpush.xpose.msra.mxu0 0.0
    %321 = vmatpush.xpose.msra.mxu0 %v172
    %322 = vmatmul.f32.gmra.mxu0 %v195
    %v323 = vpop.f32.mrf.mxu0
    %v324 = vadd.f32 %v304, %v323
    %325 = vdwg.mxu0
    %326 = vmatpush.xpose.msra.mxu0 0.0
    %327 = vmatpush.xpose.msra.mxu0 0.0
    %328 = vmatpush.xpose.msra.mxu0 0.0
    %329 = vmatpush.xpose.msra.mxu0 0.0
    %330 = vmatpush.xpose.msra.mxu0 0.0
    %331 = vmatpush.xpose.msra.mxu0 0.0
    %332 = vmatpush.xpose.msra.mxu0 0.0
    %333 = vmatpush.xpose.msra.mxu0 0.0
    %334 = vmatpush.xpose.msra.mxu0 0.0
    %335 = vmatpush.xpose.msra.mxu0 0.0
    %336 = vmatpush.xpose.msra.mxu0 0.0
    %337 = vmatpush.xpose.msra.mxu0 0.0
    %338 = vmatpush.xpose.msra.mxu0 0.0
    %339 = vmatpush.xpose.msra.mxu0 0.0
    %340 = vmatpush.xpose.msra.mxu0 0.0
    %341 = vmatpush.xpose.msra.mxu0 %v173
    %342 = vmatmul.f32.gmra.mxu0 %v196
    %v343 = vpop.f32.mrf.mxu0
    %v344 = vadd.f32 %v324, %v343
    %345 = vdwg.mxu0
    %346 = vmatpush.xpose.msra.mxu0 0.0
    %347 = vmatpush.xpose.msra.mxu0 0.0
    %348 = vmatpush.xpose.msra.mxu0 0.0
    %349 = vmatpush.xpose.msra.mxu0 0.0
    %350 = vmatpush.xpose.msra.mxu0 0.0
    %351 = vmatpush.xpose.msra.mxu0 0.0
    %352 = vmatpush.xpose.msra.mxu0 0.0
    %353 = vmatpush.xpose.msra.mxu0 0.0
    %354 = vmatpush.xpose.msra.mxu0 0.0
    %355 = vmatpush.xpose.msra.mxu0 0.0
    %356 = vmatpush.xpose.msra.mxu0 0.0
    %357 = vmatpush.xpose.msra.mxu0 0.0
    %358 = vmatpush.xpose.msra.mxu0 0.0
    %359 = vmatpush.xpose.msra.mxu0 0.0
    %360 = vmatpush.xpose.msra.mxu0 0.0
    %361 = vmatpush.xpose.msra.mxu0 %v174
    %362 = vmatmul.f32.gmra.mxu0 %v197
    %v363 = vpop.f32.mrf.mxu0
    %v364 = vadd.f32 %v344, %v363
    %365 = vdwg.mxu0
    %vm366 = vcmask 60416
    %367 = vst.msk [vmem:[%s4 + $0x8] sm:$0xf] %vm366, %v364
    %s368 = scalar_lea.vmem [#allocation4], 32
    %v369 = vld [vmem:[%s368] sm:$0xff]
    %v370 = vld [vmem:[%s368 + $0x8] sm:$0xff]
    %v371 = vld [vmem:[%s368 + $0x10] sm:$0xff]
    %v372 = vld [vmem:[%s368 + $0x18] sm:$0xff]
    %377 = vst [vmem:[#allocation1] ss:$2 sm:$0xff] %v369
    %s378 = scalar_lea.vmem [#allocation1], 16
    %379 = vst [vmem:[%s378] ss:$2 sm:$0xff] %v370
    %s380 = scalar_lea.vmem [#allocation1], 32
    %381 = vst [vmem:[%s380] ss:$2 sm:$0xff] %v371
    %s382 = scalar_lea.vmem [#allocation1], 48
    %383 = vst [vmem:[%s382] ss:$2 sm:$0xff] %v372
    %v384 = vld.sshfl [vmem:[#allocation1] sm:$0xff pattern:$0x75316420]
    %v385 = vld.sshfl [vmem:[#allocation1 + $0x8] sm:$0xff pattern:$0x75316420]
    %v386 = vld.sshfl [vmem:[#allocation1 + $0x10] sm:$0xff pattern:$0x75316420]
    %v387 = vld.sshfl [vmem:[#allocation1 + $0x18] sm:$0xff pattern:$0x75316420]
    %v388 = vld.sshfl [vmem:[#allocation1 + $0x20] sm:$0xff pattern:$0x75316420]
    %v389 = vld.sshfl [vmem:[#allocation1 + $0x28] sm:$0xff pattern:$0x75316420]
    %v390 = vld.sshfl [vmem:[#allocation1 + $0x30] sm:$0xff pattern:$0x75316420]
    %v391 = vld.sshfl [vmem:[#allocation1 + $0x38] sm:$0xff pattern:$0x75316420]
    %400 = vmatpush.xpose.msra.mxu0 0.0
    %401 = vmatpush.xpose.msra.mxu0 0.0
    %402 = vmatpush.xpose.msra.mxu0 0.0
    %403 = vmatpush.xpose.msra.mxu0 0.0
    %404 = vmatpush.xpose.msra.mxu0 0.0
    %405 = vmatpush.xpose.msra.mxu0 0.0
    %406 = vmatpush.xpose.msra.mxu0 0.0
    %407 = vmatpush.xpose.msra.mxu0 0.0
    %408 = vmatpush.xpose.msra.mxu0 0.0
    %409 = vmatpush.xpose.msra.mxu0 0.0
    %410 = vmatpush.xpose.msra.mxu0 0.0
    %411 = vmatpush.xpose.msra.mxu0 0.0
    %412 = vmatpush.xpose.msra.mxu0 0.0
    %413 = vmatpush.xpose.msra.mxu0 0.0
    %414 = vmatpush.xpose.msra.mxu0 0.0
    %415 = vmatpush.xpose.msra.mxu0 %v167
    %416 = vmatmul.f32.gmra.mxu0 %v384
    %v417 = vpop.f32.mrf.mxu0
    %v418 = vadd.f32 0.0, %v417
    %419 = vdwg.mxu0
    %420 = vmatpush.xpose.msra.mxu0 0.0
    %421 = vmatpush.xpose.msra.mxu0 0.0
    %422 = vmatpush.xpose.msra.mxu0 0.0
    %423 = vmatpush.xpose.msra.mxu0 0.0
    %424 = vmatpush.xpose.msra.mxu0 0.0
    %425 = vmatpush.xpose.msra.mxu0 0.0
    %426 = vmatpush.xpose.msra.mxu0 0.0
    %427 = vmatpush.xpose.msra.mxu0 0.0
    %428 = vmatpush.xpose.msra.mxu0 0.0
    %429 = vmatpush.xpose.msra.mxu0 0.0
    %430 = vmatpush.xpose.msra.mxu0 0.0
    %431 = vmatpush.xpose.msra.mxu0 0.0
    %432 = vmatpush.xpose.msra.mxu0 0.0
    %433 = vmatpush.xpose.msra.mxu0 0.0
    %434 = vmatpush.xpose.msra.mxu0 0.0
    %435 = vmatpush.xpose.msra.mxu0 %v168
    %436 = vmatmul.f32.gmra.mxu0 %v385
    %v437 = vpop.f32.mrf.mxu0
    %v438 = vadd.f32 %v418, %v437
    %439 = vdwg.mxu0
    %440 = vmatpush.xpose.msra.mxu0 0.0
    %441 = vmatpush.xpose.msra.mxu0 0.0
    %442 = vmatpush.xpose.msra.mxu0 0.0
    %443 = vmatpush.xpose.msra.mxu0 0.0
    %444 = vmatpush.xpose.msra.mxu0 0.0
    %445 = vmatpush.xpose.msra.mxu0 0.0
    %446 = vmatpush.xpose.msra.mxu0 0.0
    %447 = vmatpush.xpose.msra.mxu0 0.0
    %448 = vmatpush.xpose.msra.mxu0 0.0
    %449 = vmatpush.xpose.msra.mxu0 0.0
    %450 = vmatpush.xpose.msra.mxu0 0.0
    %451 = vmatpush.xpose.msra.mxu0 0.0
    %452 = vmatpush.xpose.msra.mxu0 0.0
    %453 = vmatpush.xpose.msra.mxu0 0.0
    %454 = vmatpush.xpose.msra.mxu0 0.0
    %455 = vmatpush.xpose.msra.mxu0 %v169
    %456 = vmatmul.f32.gmra.mxu0 %v386
    %v457 = vpop.f32.mrf.mxu0
    %v458 = vadd.f32 %v438, %v457
    %459 = vdwg.mxu0
    %460 = vmatpush.xpose.msra.mxu0 0.0
    %461 = vmatpush.xpose.msra.mxu0 0.0
    %462 = vmatpush.xpose.msra.mxu0 0.0
    %463 = vmatpush.xpose.msra.mxu0 0.0
    %464 = vmatpush.xpose.msra.mxu0 0.0
    %465 = vmatpush.xpose.msra.mxu0 0.0
    %466 = vmatpush.xpose.msra.mxu0 0.0
    %467 = vmatpush.xpose.msra.mxu0 0.0
    %468 = vmatpush.xpose.msra.mxu0 0.0
    %469 = vmatpush.xpose.msra.mxu0 0.0
    %470 = vmatpush.xpose.msra.mxu0 0.0
    %471 = vmatpush.xpose.msra.mxu0 0.0
    %472 = vmatpush.xpose.msra.mxu0 0.0
    %473 = vmatpush.xpose.msra.mxu0 0.0
    %474 = vmatpush.xpose.msra.mxu0 0.0
    %475 = vmatpush.xpose.msra.mxu0 %v170
    %476 = vmatmul.f32.gmra.mxu0 %v387
    %v477 = vpop.f32.mrf.mxu0
    %v478 = vadd.f32 %v458, %v477
    %479 = vdwg.mxu0
    %480 = vmatpush.xpose.msra.mxu0 0.0
    %481 = vmatpush.xpose.msra.mxu0 0.0
    %482 = vmatpush.xpose.msra.mxu0 0.0
    %483 = vmatpush.xpose.msra.mxu0 0.0
    %484 = vmatpush.xpose.msra.mxu0 0.0
    %485 = vmatpush.xpose.msra.mxu0 0.0
    %486 = vmatpush.xpose.msra.mxu0 0.0
    %487 = vmatpush.xpose.msra.mxu0 0.0
    %488 = vmatpush.xpose.msra.mxu0 0.0
    %489 = vmatpush.xpose.msra.mxu0 0.0
    %490 = vmatpush.xpose.msra.mxu0 0.0
    %491 = vmatpush.xpose.msra.mxu0 0.0
    %492 = vmatpush.xpose.msra.mxu0 0.0
    %493 = vmatpush.xpose.msra.mxu0 0.0
    %494 = vmatpush.xpose.msra.mxu0 0.0
    %495 = vmatpush.xpose.msra.mxu0 %v171
    %496 = vmatmul.f32.gmra.mxu0 %v388
    %v497 = vpop.f32.mrf.mxu0
    %v498 = vadd.f32 %v478, %v497
    %499 = vdwg.mxu0
    %500 = vmatpush.xpose.msra.mxu0 0.0
    %501 = vmatpush.xpose.msra.mxu0 0.0
    %502 = vmatpush.xpose.msra.mxu0 0.0
    %503 = vmatpush.xpose.msra.mxu0 0.0
    %504 = vmatpush.xpose.msra.mxu0 0.0
    %505 = vmatpush.xpose.msra.mxu0 0.0
    %506 = vmatpush.xpose.msra.mxu0 0.0
    %507 = vmatpush.xpose.msra.mxu0 0.0
    %508 = vmatpush.xpose.msra.mxu0 0.0
    %509 = vmatpush.xpose.msra.mxu0 0.0
    %510 = vmatpush.xpose.msra.mxu0 0.0
    %511 = vmatpush.xpose.msra.mxu0 0.0
    %512 = vmatpush.xpose.msra.mxu0 0.0
    %513 = vmatpush.xpose.msra.mxu0 0.0
    %514 = vmatpush.xpose.msra.mxu0 0.0
    %515 = vmatpush.xpose.msra.mxu0 %v172
    %516 = vmatmul.f32.gmra.mxu0 %v389
    %v517 = vpop.f32.mrf.mxu0
    %v518 = vadd.f32 %v498, %v517
    %519 = vdwg.mxu0
    %520 = vmatpush.xpose.msra.mxu0 0.0
    %521 = vmatpush.xpose.msra.mxu0 0.0
    %522 = vmatpush.xpose.msra.mxu0 0.0
    %523 = vmatpush.xpose.msra.mxu0 0.0
    %524 = vmatpush.xpose.msra.mxu0 0.0
    %525 = vmatpush.xpose.msra.mxu0 0.0
    %526 = vmatpush.xpose.msra.mxu0 0.0
    %527 = vmatpush.xpose.msra.mxu0 0.0
    %528 = vmatpush.xpose.msra.mxu0 0.0
    %529 = vmatpush.xpose.msra.mxu0 0.0
    %530 = vmatpush.xpose.msra.mxu0 0.0
    %531 = vmatpush.xpose.msra.mxu0 0.0
    %532 = vmatpush.xpose.msra.mxu0 0.0
    %533 = vmatpush.xpose.msra.mxu0 0.0
    %534 = vmatpush.xpose.msra.mxu0 0.0
    %535 = vmatpush.xpose.msra.mxu0 %v173
    %536 = vmatmul.f32.gmra.mxu0 %v390
    %v537 = vpop.f32.mrf.mxu0
    %v538 = vadd.f32 %v518, %v537
    %539 = vdwg.mxu0
    %540 = vmatpush.xpose.msra.mxu0 0.0
    %541 = vmatpush.xpose.msra.mxu0 0.0
    %542 = vmatpush.xpose.msra.mxu0 0.0
    %543 = vmatpush.xpose.msra.mxu0 0.0
    %544 = vmatpush.xpose.msra.mxu0 0.0
    %545 = vmatpush.xpose.msra.mxu0 0.0
    %546 = vmatpush.xpose.msra.mxu0 0.0
    %547 = vmatpush.xpose.msra.mxu0 0.0
    %548 = vmatpush.xpose.msra.mxu0 0.0
    %549 = vmatpush.xpose.msra.mxu0 0.0
    %550 = vmatpush.xpose.msra.mxu0 0.0
    %551 = vmatpush.xpose.msra.mxu0 0.0
    %552 = vmatpush.xpose.msra.mxu0 0.0
    %553 = vmatpush.xpose.msra.mxu0 0.0
    %554 = vmatpush.xpose.msra.mxu0 0.0
    %555 = vmatpush.xpose.msra.mxu0 %v174
    %556 = vmatmul.f32.gmra.mxu0 %v391
    %v557 = vpop.f32.mrf.mxu0
    %v558 = vadd.f32 %v538, %v557
    %559 = vdwg.mxu0
    %560 = vst.msk [vmem:[%s165 + $0x8] sm:$0xf] %vm366, %v558
    // Predicated region
    $region34: #{tpu_custom_call.1} parent=1 // pred_check
      _
    $region35: #{tpu_custom_call.1} parent=1 // pred_check_branch
      %562 = sbr.rel (0) target = $region37
    $region36: #{tpu_custom_call.1} parent=1 // pred_region
      _
    $region37: #{tpu_custom_call.1} parent=1 // pred_fallthru
      _
    // Predicated region
    $region38: #{tpu_custom_call.1} parent=1 // pred_check
      _
    $region39: #{tpu_custom_call.1} parent=1 // pred_check_branch
      %564 = sbr.rel (0) target = $region41
    $region40: #{tpu_custom_call.1} parent=1 // pred_region
      _
    $region41: #{tpu_custom_call.1} parent=1 // pred_fallthru
      _
    %565 = vsyncpa [#allocation3], 1
    %566 = vsyncpa [#allocation5], 1
    %567 = vsyncpa [#allocation8], 1

</llo_original>
